<compile_context>
chip_gen: v5e
topology: v5e:2x2
jax: 0.10.0
libtpu: 0.0.40
codegen_flags: <defaults>
</compile_context>

<pallas_src>
import functools
import math

import jax
import jax.numpy as jnp
from jax.experimental import pallas as pl
from jax.experimental.pallas import tpu as pltpu

TM_MAX = 512            # max row tile for all Pallas kernels
TK_MAX = 896            # max K-block width (multiple of 128)
VMEM_LIMIT = 32 * 1024 * 1024
BN_SCALE = 1.0 / math.sqrt(1.0 + 1e-5)  # identity-initialized BatchNorm folded into conv weights


def _round_up(x, m):
    return ((x + m - 1) // m) * m


# ----------------------------------------------------------------------------------
# Pallas kernels
# ----------------------------------------------------------------------------------
def _matmul_kernel(x_ref, w_ref, b_ref, o_ref, acc_ref, *, relu):
    """bf16 x bf16 -> f32 accumulate over the K grid axis; bias+ReLU fused at last K step."""
    @pl.when(pl.program_id(1) == 0)
    def _():
        acc_ref[...] = jnp.zeros_like(acc_ref)

    acc_ref[...] += jnp.dot(x_ref[...], w_ref[...], preferred_element_type=jnp.float32)

    @pl.when(pl.program_id(1) == pl.num_programs(1) - 1)
    def _():
        acc = acc_ref[...] + b_ref[...]
        if relu:
            acc = jnp.maximum(acc, 0.0)
        o_ref[...] = acc.astype(o_ref.dtype)


def pallas_matmul(x, w, b, relu=False, out_dtype=jnp.bfloat16):
    """x: (M, K), w: (K, N), b: (N,) -> (M, N) in out_dtype.

    bf16 MXU matmul with f32 accumulation; M tiled (parallel), K tiled (arbitrary,
    accumulated in a VMEM scratch); bias + optional ReLU fused.
    """
    M, K = x.shape
    N = w.shape[1]
    x = x.astype(jnp.bfloat16)
    w = w.astype(jnp.bfloat16)
    b = b.astype(jnp.float32).reshape(1, N)

    tm = min(TM_MAX, _round_up(M, 128))
    Mp = _round_up(M, tm)
    k128 = _round_up(K, 128)
    nk = -(-k128 // TK_MAX)
    tk = _round_up(-(-k128 // nk), 128)
    Kp = nk * tk

    if Mp != M or Kp != K:
        x = jnp.pad(x, ((0, Mp - M), (0, Kp - K)))
    if Kp != K:
        w = jnp.pad(w, ((0, Kp - K), (0, 0)))

    out = pl.pallas_call(
        functools.partial(_matmul_kernel, relu=relu),
        out_shape=jax.ShapeDtypeStruct((Mp, N), out_dtype),
        grid_spec=pltpu.PrefetchScalarGridSpec(
            num_scalar_prefetch=0,
            grid=(Mp // tm, nk),
            in_specs=[
                pl.BlockSpec((tm, tk), lambda i, k: (i, k)),
                pl.BlockSpec((tk, N), lambda i, k: (k, 0)),
                pl.BlockSpec((1, N), lambda i, k: (0, 0)),
            ],
            out_specs=pl.BlockSpec((tm, N), lambda i, k: (i, 0)),
            scratch_shapes=[pltpu.VMEM((tm, N), jnp.float32)],
        ),
        compiler_params=pltpu.CompilerParams(
            dimension_semantics=("parallel", "arbitrary"),
            vmem_limit_bytes=VMEM_LIMIT,
        ),
    )(x, w, b)
    return out[:M]


def _upsample_softargmax_kernel(t_ref, ud_ref, d_ref, o_ref):
    """Fused D-axis trilinear interpolation (matmul) + softmax + disparity expectation."""
    c = jnp.dot(t_ref[...], ud_ref[...], preferred_element_type=jnp.float32)  # (tm, numIndex)
    m = jnp.max(c, axis=-1, keepdims=True)
    e = jnp.exp(c - m)
    s = jnp.sum(e, axis=-1, keepdims=True)
    # NOTE: output is (tm, 1) — lane-sparse store, but the total final write is tiny (B*h*w f32).
    o_ref[...] = jnp.sum(e * d_ref[...], axis=-1, keepdims=True) / s


def pallas_upsample_softargmax(t, ud, disp_vals):
    """t: (M, Din) low-res depth profiles, ud: (Din, numIndex) interp matrix -> (M,) f32."""
    M, Din = t.shape
    nI = ud.shape[1]
    t = t.astype(jnp.bfloat16)
    ud = ud.astype(jnp.bfloat16)
    d = disp_vals.astype(jnp.float32).reshape(1, nI)

    tm = min(TM_MAX, _round_up(M, 128))
    Mp = _round_up(M, tm)
    if Mp != M:
        t = jnp.pad(t, ((0, Mp - M), (0, 0)))

    out = pl.pallas_call(
        _upsample_softargmax_kernel,
        out_shape=jax.ShapeDtypeStruct((Mp, 1), jnp.float32),
        grid_spec=pltpu.PrefetchScalarGridSpec(
            num_scalar_prefetch=0,
            grid=(Mp // tm,),
            in_specs=[
                pl.BlockSpec((tm, Din), lambda i: (i, 0)),
                pl.BlockSpec((Din, nI), lambda i: (0, 0)),
                pl.BlockSpec((1, nI), lambda i: (0, 0)),
            ],
            out_specs=pl.BlockSpec((tm, 1), lambda i: (i, 0)),
        ),
        compiler_params=pltpu.CompilerParams(
            dimension_semantics=("parallel",),
            vmem_limit_bytes=VMEM_LIMIT,
        ),
    )(t, ud, d)
    return out[:M, 0]


# ----------------------------------------------------------------------------------
# Conv wrappers (im2col glue in JAX -> bf16, matmul in Pallas)
# ----------------------------------------------------------------------------------
def conv2d(x, w, b, stride=(1, 1), pad=(1, 1), relu=False):
    x = x.astype(jnp.bfloat16)
    B, C, H, W = x.shape
    Co, Ci, kh, kw = w.shape
    sh, sw = stride
    ph, pw = pad
    xp = jnp.pad(x, ((0, 0), (0, 0), (ph, ph), (pw, pw)))
    Ho = (H + 2 * ph - kh) // sh + 1
    Wo = (W + 2 * pw - kw) // sw + 1
    cols = []
    for dy in range(kh):
        for dx in range(kw):
            cols.append(xp[:, :, dy:dy + Ho * sh:sh, dx:dx + Wo * sw:sw])
    patches = jnp.stack(cols, axis=2).reshape(B, C * kh * kw, Ho, Wo)
    X = patches.transpose(0, 2, 3, 1).reshape(B * Ho * Wo, C * kh * kw)
    Y = pallas_matmul(X, w.reshape(Co, -1).T, b, relu=relu)
    return Y.reshape(B, Ho, Wo, Co).transpose(0, 3, 1, 2)


def conv3d(x, w, b, stride=(1, 1, 1), pad=(1, 1, 1), relu=False):
    x = x.astype(jnp.bfloat16)
    B, C, D, H, W = x.shape
    Co, Ci, kd, kh, kw = w.shape
    sd, sh, sw = stride
    pd, ph, pw = pad
    xp = jnp.pad(x, ((0, 0), (0, 0), (pd, pd), (ph, ph), (pw, pw)))
    Do = (D + 2 * pd - kd) // sd + 1
    Ho = (H + 2 * ph - kh) // sh + 1
    Wo = (W + 2 * pw - kw) // sw + 1
    cols = []
    for dz in range(kd):
        for dy in range(kh):
            for dx in range(kw):
                cols.append(
                    xp[:, :, dz:dz + Do * sd:sd, dy:dy + Ho * sh:sh, dx:dx + Wo * sw:sw]
                )
    patches = jnp.stack(cols, axis=2).reshape(B, C * kd * kh * kw, Do, Ho, Wo)
    X = patches.transpose(0, 2, 3, 4, 1).reshape(B * Do * Ho * Wo, C * kd * kh * kw)
    Y = pallas_matmul(X, w.reshape(Co, -1).T, b, relu=relu)
    return Y.reshape(B, Do, Ho, Wo, Co).transpose(0, 4, 1, 2, 3)


def conv_transpose3d(x, w_t, b, relu=False):
    """ConvTranspose3d(k=3, s=2, p=1, out_pad=1) via sub-pixel phase decomposition.

    For each output phase along an axis: even positions use kernel tap [1];
    odd positions use taps [2, 0] over (x[m], x[m+1]) (right zero pad of 1).
    `w_t` is the raw PyTorch transpose-conv weight (Cin, Cout, 3, 3, 3), BN already folded.
    """
    B, C, D, H, W = x.shape
    Cout = w_t.shape[1]
    x = x.astype(jnp.bfloat16)
    out = jnp.zeros((B, Cout, 2 * D, 2 * H, 2 * W), jnp.bfloat16)
    taps = {0: [1], 1: [2, 0]}
    for pd in (0, 1):
        for ph in (0, 1):
            for pw in (0, 1):
                wk = w_t[:, :, taps[pd]][:, :, :, taps[ph]][:, :, :, :, taps[pw]]
                wk = wk.transpose(1, 0, 2, 3, 4)  # -> (Cout, Cin, kd', kh', kw')
                xp = jnp.pad(x, ((0, 0), (0, 0), (0, pd), (0, ph), (0, pw)))
                y = conv3d(xp, wk, b, stride=(1, 1, 1), pad=(0, 0, 0), relu=relu)
                out = out.at[:, :, pd::2, ph::2, pw::2].set(y)
    return out


# ----------------------------------------------------------------------------------
# grid_sample (bilinear, align_corners=True, zeros padding) — plain JAX gather
# ----------------------------------------------------------------------------------
def grid_sample_bilinear(feat, grid):
    B, C, H, W = feat.shape
    gx = (grid[..., 0] + 1.0) * 0.5 * (W - 1)
    gy = (grid[..., 1] + 1.0) * 0.5 * (H - 1)
    x0 = jnp.floor(gx)
    y0 = jnp.floor(gy)
    x1 = x0 + 1.0
    y1 = y0 + 1.0
    flat = feat.reshape(B, C, H * W)

    def corner(xi, yi, wgt):
        valid = (xi >= 0) & (xi <= W - 1) & (yi >= 0) & (yi <= H - 1)
        xc = jnp.clip(xi, 0, W - 1).astype(jnp.int32)
        yc = jnp.clip(yi, 0, H - 1).astype(jnp.int32)
        idx = yc * W + xc
        Bg, Hg, Wg = idx.shape
        g = jnp.take_along_axis(
            flat, jnp.broadcast_to(idx.reshape(B, 1, Hg * Wg), (B, C, Hg * Wg)), axis=2
        ).reshape(B, C, Hg, Wg)
        return g * (wgt * valid.astype(jnp.float32))[:, None]

    return (
        corner(x0, y0, (x1 - gx) * (y1 - gy))
        + corner(x1, y0, (gx - x0) * (y1 - gy))
        + corner(x0, y1, (x1 - gx) * (gy - y0))
        + corner(x1, y1, (gx - x0) * (gy - y0))
    )


# ----------------------------------------------------------------------------------
# Trilinear upsample (align_corners=True) + softmax + disparity regression
# ----------------------------------------------------------------------------------
def interp_matrix(out_size, in_size):
    if in_size == 1:
        return jnp.ones((out_size, 1), jnp.float32)
    pos = jnp.arange(out_size, dtype=jnp.float32) * (in_size - 1) / max(out_size - 1, 1)
    lo = jnp.minimum(jnp.floor(pos).astype(jnp.int32), in_size - 2)
    hi = lo + 1
    wh = pos - lo.astype(jnp.float32)
    wl = 1.0 - wh
    M = jnp.zeros((out_size, in_size), jnp.float32)
    M = M.at[jnp.arange(out_size), lo].add(wl)
    M = M.at[jnp.arange(out_size), hi].add(wh)
    return M


def upsample_and_regress(cost3, numIndex, h, w):
    """cost3: (B,1,D,H4,W4) -> trilinear upsample to (numIndex,h,w), softmax over depth,
    disparity expectation. The D-axis interp + softmax + expectation are fused in Pallas."""
    B, _, D, H4, W4 = cost3.shape
    Uw = interp_matrix(w, W4)
    Uh = interp_matrix(h, H4)
    Ud = interp_matrix(numIndex, D)
    zero = lambda n: jnp.zeros((n,), jnp.float32)
    t = pallas_matmul(cost3[:, 0].reshape(B * D * H4, W4), Uw.T, zero(w))        # W-axis
    t = t.reshape(B, D, H4, w).transpose(0, 1, 3, 2).reshape(B * D * w, H4)
    t = pallas_matmul(t, Uh.T, zero(h))                                          # H-axis
    t = t.reshape(B, D, w, h).transpose(0, 2, 3, 1).reshape(B * w * h, D)
    pred = pallas_upsample_softargmax(t, Ud.T, jnp.arange(numIndex, dtype=jnp.float32))
    return pred.reshape(B, w, h).transpose(0, 2, 1)  # (B, h, w)


# ----------------------------------------------------------------------------------
# Parameter construction (deterministic, PyTorch-style init, BN folded)
# ----------------------------------------------------------------------------------
def init_conv3d(key, cin, cout, k, bias=True):
    if isinstance(k, int):
        k = (k, k, k)
    n = k[0] * k[1] * k[2] * cout
    kw_, kb_ = jax.random.split(key)
    w = jax.random.normal(kw_, (cout, cin) + k, jnp.float32) * math.sqrt(2.0 / n)
    b = (jax.random.normal(kb_, (cout,), jnp.float32) * 0.01
         if bias else jnp.zeros((cout,), jnp.float32))
    return w, b


def init_convbn3d(key, cin, cout, k=3):
    w, _ = init_conv3d(key, cin, cout, k, bias=False)
    return w * BN_SCALE, jnp.zeros((cout,), jnp.float32)


def init_deconvbn3d(key, cin, cout, k=3):
    n = k * k * k * cout
    # raw PyTorch ConvTranspose3d layout (Cin, Cout, k, k, k), identity BN folded
    w = jax.random.normal(key, (cin, cout, k, k, k), jnp.float32) * math.sqrt(2.0 / n)
    return w * BN_SCALE, jnp.zeros((cout,), jnp.float32)


def init_convbn2d(key, cin, cout, k=3):
    n = k * k * cout
    w = jax.random.normal(key, (cout, cin, k, k), jnp.float32) * math.sqrt(2.0 / n)
    return w * BN_SCALE, jnp.zeros((cout,), jnp.float32)


def build_params(key, numCam=4):
    keys = iter(jax.random.split(key, 64))
    p = {}
    p["fe"] = {
        "c0": init_convbn2d(next(keys), 3, 16, 3),
        "c1": init_convbn2d(next(keys), 16, 32, 3),
    }
    p["mvc0"] = init_conv3d(next(keys), 32 * numCam, 64, (1, 1, 1), bias=True)
    p["mvc1"] = init_conv3d(next(keys), 64, 64, (1, 3, 3), bias=True)
    p["dres0_0"] = init_convbn3d(next(keys), 64, 32)
    p["dres0_1"] = init_convbn3d(next(keys), 32, 32)
    p["dres1_0"] = init_convbn3d(next(keys), 32, 32)
    p["dres1_1"] = init_convbn3d(next(keys), 32, 32)
    for name in ["dres2", "dres3", "dres4"]:
        p[name] = {
            "conv1": init_convbn3d(next(keys), 32, 64),
            "conv2": init_convbn3d(next(keys), 64, 64),
            "conv3": init_convbn3d(next(keys), 64, 64),
            "conv4": init_convbn3d(next(keys), 64, 64),
            "conv5": init_deconvbn3d(next(keys), 64, 64),
            "conv6": init_deconvbn3d(next(keys), 64, 32),
        }
    for name in ["classif1", "classif2", "classif3"]:
        p[name] = {
            "c0": init_convbn3d(next(keys), 32, 32),
            "c1": init_conv3d(next(keys), 32, 1, 3, bias=False),
        }
    return p


# ----------------------------------------------------------------------------------
# Sub-module forwards
# ----------------------------------------------------------------------------------
def feature_extraction_forward(p, img):
    t = conv2d(img, *p["c0"], stride=(2, 2), pad=(1, 1), relu=True)
    t = conv2d(t, *p["c1"], stride=(2, 2), pad=(1, 1), relu=True)
    return t  # (B, 32, h/4, w/4)


def hourglass_forward(p, x, presqu, postsqu):
    out = conv3d(x, *p["conv1"], stride=(2, 2, 2), relu=True)
    pre = conv3d(out, *p["conv2"], relu=False)
    pre = jnp.maximum(pre + postsqu, 0.0) if postsqu is not None else jnp.maximum(pre, 0.0)
    out = conv3d(pre, *p["conv3"], stride=(2, 2, 2), relu=True)
    out = conv3d(out, *p["conv4"], relu=True)
    up5 = conv_transpose3d(out, *p["conv5"])
    post = jnp.maximum(up5 + presqu, 0.0) if presqu is not None else jnp.maximum(up5 + pre, 0.0)
    out = conv_transpose3d(post, *p["conv6"])
    return out, pre, post


def classif_forward(p, x):
    t = conv3d(x, *p["c0"], relu=True)
    return conv3d(t, *p["c1"], relu=False)  # Cout=1 (N=1 matmul; cheap relative to the 64ch convs)


# ----------------------------------------------------------------------------------
# Full forward (eval path: returns pred3 of shape (B, h, w))
# ----------------------------------------------------------------------------------
def sphere_sweep_mode_forward(params, imgs, grids, numIndex):
    numCam = len(imgs)
    B, _, h, w = imgs[0].shape
    assert grids[0].shape[0] == numIndex // 4

    cost_parts = []
    for i in range(numCam):
        feat = feature_extraction_forward(params["fe"], imgs[i])
        per_index = []
        for j in range(grids[i].shape[0]):
            g = jnp.broadcast_to(grids[i][j:j + 1], (B,) + grids[i].shape[1:])
            samp = grid_sample_bilinear(feat, g).astype(jnp.bfloat16)
            per_index.append(samp[:, :, None])
        cost_parts.append(jnp.concatenate(per_index, axis=2))  # (B, 32, D, Hg, Wg)
    cost = jnp.concatenate(cost_parts, axis=1)  # (B, 32*numCam, D, Hg, Wg)

    cost = conv3d(cost, *params["mvc0"], pad=(0, 0, 0), relu=True)   # 1x1x1
    cost = conv3d(cost, *params["mvc1"], pad=(0, 1, 1), relu=True)   # (1,3,3)

    c = conv3d(cost, *params["dres0_0"], relu=True)
    cost0 = conv3d(c, *params["dres0_1"], relu=True)
    d1 = conv3d(cost0, *params["dres1_0"], relu=True)
    d1 = conv3d(d1, *params["dres1_1"], relu=False)
    cost0 = d1 + cost0

    out1, pre1, post1 = hourglass_forward(params["dres2"], cost0, None, None)
    out1 = out1 + cost0
    out2, pre2, post2 = hourglass_forward(params["dres3"], out1, pre1, post1)
    out2 = out2 + cost0
    out3, pre3, post3 = hourglass_forward(params["dres4"], out2, pre1, post2)
    out3 = out3 + cost0

    cost1 = classif_forward(params["classif1"], out1)
    cost2 = classif_forward(params["classif2"], out2) + cost1
    cost3 = classif_forward(params["classif3"], out3) + cost2

    return upsample_and_regress(cost3, numIndex, h, w)  # (B, h, w)


# ----------------------------------------------------------------------------------
if __name__ == "__main__":
    key = jax.random.PRNGKey(0)
    numCam, numIndex = 4, 16
    B, h, w = 2, 32, 32  # must be divisible by 16 for the hourglass down/up path

    kp, ki, kg = jax.random.split(key, 3)
    params = build_params(kp, numCam=numCam)
    img_keys = jax.random.split(ki, numCam)
    grid_keys = jax.random.split(kg, numCam)
    imgs = [jax.random.normal(img_keys[i], (B, 3, h, w), jnp.float32) for i in range(numCam)]
    grids = [
        jax.random.uniform(grid_keys[i], (numIndex // 4, h // 4, w // 4, 2),
                           jnp.float32, minval=-1.0, maxval=1.0)
        for i in range(numCam)
    ]

    pred3 = sphere_sweep_mode_forward(params, imgs, grids, numIndex)
    jax.block_until_ready(pred3)
    assert pred3.shape == (B, h, w)
    assert bool(jnp.all(jnp.isfinite(pred3)))
    print("KERNEL_OK")
</pallas_src>

<mosaic_0001>
module attributes {stable_mosaic.version = 11 : i64} {
  func.func @_matmul_kernel(%arg0: i32, %arg1: i32, %arg2: memref<512x128xbf16, #tpu.memory_space<vmem>>, %arg3: memref<128x16xbf16, #tpu.memory_space<vmem>>, %arg4: memref<1x16xf32, #tpu.memory_space<vmem>>, %arg5: memref<512x16xbf16, #tpu.memory_space<vmem>>, %arg6: memref<512x16xf32, #tpu.memory_space<vmem>>) attributes {dimension_semantics = [#tpu.dimension_semantics<parallel>, #tpu.dimension_semantics<arbitrary>], iteration_bounds = array<i64: 1, 1>, scalar_prefetch = 0 : i64, scratch_operands = 1 : i64, tpu.core_type = #tpu.core_type<tc>, window_params = [{transform_indices = @transform_0, window_bounds = array<i64: 512, 128>}, {transform_indices = @transform_1, window_bounds = array<i64: 128, 16>}, {pipeline_mode = #tpu.pipeline_mode<synchronous>, transform_indices = @transform_2, window_bounds = array<i64: 1, 16>}, {transform_indices = @transform_3, window_bounds = array<i64: 512, 16>}]} {
    %c0_i32 = arith.constant 0 : i32
    %0 = arith.cmpi eq, %arg1, %c0_i32 : i32
    %1 = arith.extui %0 : i1 to i32
    %c0_i32_0 = arith.constant 0 : i32
    %2 = arith.cmpi ne, %1, %c0_i32_0 : i32
    scf.if %2 {
      %cst_10 = arith.constant 0.000000e+00 : f32
      %12 = vector.broadcast %cst_10 : f32 to vector<512x16xf32>
      %c0_11 = arith.constant 0 : index
      %c0_12 = arith.constant 0 : index
      %13 = vector.load %arg6[%c0_11, %c0_12] : memref<512x16xf32, #tpu.memory_space<vmem>>, vector<512x16xf32>
      tpu.vector_store %arg6[%c0_11, %c0_12], %12 {strides = array<i32>} : memref<512x16xf32, #tpu.memory_space<vmem>>, vector<512x16xf32>,
    } else {
    }
    %c0 = arith.constant 0 : index
    %c0_1 = arith.constant 0 : index
    %3 = vector.load %arg6[%c0, %c0_1] : memref<512x16xf32, #tpu.memory_space<vmem>>, vector<512x16xf32>
    %c0_2 = arith.constant 0 : index
    %c0_3 = arith.constant 0 : index
    %4 = vector.load %arg2[%c0_2, %c0_3] : memref<512x128xbf16, #tpu.memory_space<vmem>>, vector<512x128xbf16>
    %c0_4 = arith.constant 0 : index
    %c0_5 = arith.constant 0 : index
    %5 = vector.load %arg3[%c0_4, %c0_5] : memref<128x16xbf16, #tpu.memory_space<vmem>>, vector<128x16xbf16>
    %cst = arith.constant dense<0.000000e+00> : vector<512x16xf32>
    %6 = tpu.matmul %4, %5, %cst {dimension_numbers = #tpu.dot_dimension_numbers<[1], [0], [0], [1], [0, 0, 1, 1], [], []>} : vector<512x128xbf16>, vector<128x16xbf16>, vector<512x16xf32> -> vector<512x16xf32>
    %7 = arith.addf %3, %6 : vector<512x16xf32>
    %c0_6 = arith.constant 0 : index
    %c0_7 = arith.constant 0 : index
    %8 = vector.load %arg6[%c0_6, %c0_7] : memref<512x16xf32, #tpu.memory_space<vmem>>, vector<512x16xf32>
    tpu.vector_store %arg6[%c0_6, %c0_7], %7 {strides = array<i32>} : memref<512x16xf32, #tpu.memory_space<vmem>>, vector<512x16xf32>,
    %c0_i32_8 = arith.constant 0 : i32
    %9 = arith.cmpi eq, %arg1, %c0_i32_8 : i32
    %10 = arith.extui %9 : i1 to i32
    %c0_i32_9 = arith.constant 0 : i32
    %11 = arith.cmpi ne, %10, %c0_i32_9 : i32
    scf.if %11 {
      %c0_10 = arith.constant 0 : index
      %c0_11 = arith.constant 0 : index
      %12 = vector.load %arg6[%c0_10, %c0_11] : memref<512x16xf32, #tpu.memory_space<vmem>>, vector<512x16xf32>
      %c0_12 = arith.constant 0 : index
      %c0_13 = arith.constant 0 : index
      %13 = vector.load %arg4[%c0_12, %c0_13] : memref<1x16xf32, #tpu.memory_space<vmem>>, vector<1x16xf32>
      %14 = vector.broadcast %13 : vector<1x16xf32> to vector<512x16xf32>
      %15 = arith.addf %12, %14 : vector<512x16xf32>
      %cst_14 = arith.constant 0.000000e+00 : f32
      %16 = vector.broadcast %cst_14 : f32 to vector<512x16xf32>
      %17 = arith.maximumf %15, %16 : vector<512x16xf32>
      %18 = arith.truncf %17 : vector<512x16xf32> to vector<512x16xbf16>
      %c0_15 = arith.constant 0 : index
      %c0_16 = arith.constant 0 : index
      %19 = vector.load %arg5[%c0_15, %c0_16] : memref<512x16xbf16, #tpu.memory_space<vmem>>, vector<512x16xbf16>
      tpu.vector_store %arg5[%c0_15, %c0_16], %18 {strides = array<i32>} : memref<512x16xbf16, #tpu.memory_space<vmem>>, vector<512x16xbf16>,
    } else {
    }
    return
  }
  func.func @transform_0(%arg0: i32, %arg1: i32) -> (i32, i32) {
    %c0_i32 = arith.constant 0 : i32
    return %arg0, %arg1 : i32, i32
  }
  func.func @transform_1(%arg0: i32, %arg1: i32) -> (i32, i32) {
    %c0_i32 = arith.constant 0 : i32
    %c0_i32_0 = arith.constant 0 : i32
    return %arg1, %c0_i32 : i32, i32
  }
  func.func @transform_2(%arg0: i32, %arg1: i32) -> (i32, i32) {
    %c0_i32 = arith.constant 0 : i32
    %c0_i32_0 = arith.constant 0 : i32
    %c0_i32_1 = arith.constant 0 : i32
    return %c0_i32, %c0_i32_0 : i32, i32
  }
  func.func @transform_3(%arg0: i32, %arg1: i32) -> (i32, i32) {
    %c0_i32 = arith.constant 0 : i32
    %c0_i32_0 = arith.constant 0 : i32
    return %arg0, %c0_i32 : i32, i32
  }
}

</mosaic_0001>

<llo_original>
// kernel: tpu_custom_call.1
$region0: #{tpu_custom_call.1}
  #allocation0 [shape = 'u32[]', space=smem, size = 0x4, offset = 0x4, fixed_abs, tag = 'smem constant byte address 0x4 - core index']
  #allocation1 [shape = 'u32[72,128]{1,0:T(1,128)}', space=vmem, size = 0x9000, scoped, tag = 'internal scratch']
  #allocation2 [shape = 'f32[512,16]{1,0:T(8,128)}', space=vmem, size = 0x40000, scoped, tag = 'scratch operand']
  %s0 = inlined_call_operand.hbm [shape: bf16[512,128], index: 0, kind: input, shape index: {}]
  %s1 = inlined_call_operand.vmem [shape: bf16[128,16], index: 1, kind: input, shape index: {}]
  %s2 = inlined_call_operand.vmem [shape: f32[1,16], index: 2, kind: input, shape index: {}]
  %s3 = inlined_call_operand.vmem [shape: bf16[512,16], index: 3, kind: output, shape index: {}]
  %s4 = sld [smem:[#allocation0]]
  $region34: #{tpu_custom_call.1} parent=0
    _
  %s6 = ssub.s32 1, %s4
  %s7 = scalar_select 0, %s6, %s4
  $region1: #{tpu_custom_call.1} parent=0
    #allocation3 [shape = 'u8[131072]{0}', space=vmem, size = 0x20000, scoped, tag = 'input window, operand 0, single buffered']
    #allocation4 [shape = 's32[1]{0}', space=sflag, size = 0x4, scoped, tag = 'scoped memory for tpu_custom_call.1']
    %8 = vsyncpa [#allocation4], 0
    // Predicated region
    $region2: #{tpu_custom_call.1} parent=1 // pred_check
      _
    $region3: #{tpu_custom_call.1} parent=1 // pred_check_branch
      %10 = sbr.rel (0) target = $region5
    $region4: #{tpu_custom_call.1} parent=1 // pred_region
      %12 = vsyncadd [#allocation4], 0
      %s13 = sshll.u32 %s0, 4
      %s14 = int_to_ptr.hbm [resolvable:$true] %s13
      %s15 = sshll.u32 [#allocation3], 4
      %s16 = int_to_ptr.vmem [resolvable:$true] %s15
      %21 = dma.hbm_to_vmem [thread:$0]  %s14, 4096, %s16, [#allocation4], 64, 64, 4
    $region5: #{tpu_custom_call.1} parent=1 // pred_fallthru
      _
    // Predicated region
    $region6: #{tpu_custom_call.1} parent=1 // pred_check
      _
    $region7: #{tpu_custom_call.1} parent=1 // pred_check_branch
      %23 = sbr.rel (0) target = $region9
    $region8: #{tpu_custom_call.1} parent=1 // pred_region
      _
    $region9: #{tpu_custom_call.1} parent=1 // pred_fallthru
      _
    // Predicated region
    $region10: #{tpu_custom_call.1} parent=1 // pred_check
      _
    $region11: #{tpu_custom_call.1} parent=1 // pred_check_branch
      %25 = sbr.rel (0) target = $region13
    $region12: #{tpu_custom_call.1} parent=1 // pred_region
      _
    $region13: #{tpu_custom_call.1} parent=1 // pred_fallthru
      _
    // Predicated region
    $region14: #{tpu_custom_call.1} parent=1 // pred_check
      _
    $region15: #{tpu_custom_call.1} parent=1 // pred_check_branch
      %27 = sbr.rel (0) target = $region17
    $region16: #{tpu_custom_call.1} parent=1 // pred_region
      %29 = dma.done [#allocation4], 4096
    $region17: #{tpu_custom_call.1} parent=1 // pred_fallthru
      _
    %p30 = scmp.eq.s32.totalorder 0, 0
    // Predicated region
    $region18: #{tpu_custom_call.1} parent=1 // pred_check
      %p31 = pneg %p30
    $region19: #{tpu_custom_call.1} parent=1 // pred_check_branch
      %33 = sbr.rel (%p31) target = $region21
    $region20: #{tpu_custom_call.1} parent=1 // pred_region
      %vm34 = vcmask 130048
      %35 = vst.msk [vmem:[#allocation2] sm:$0xff] %vm34, 0.0
      %36 = vst.msk [vmem:[#allocation2 + $0x8] sm:$0xff] %vm34, 0.0
      %37 = vst.msk [vmem:[#allocation2 + $0x10] sm:$0xff] %vm34, 0.0
      %38 = vst.msk [vmem:[#allocation2 + $0x18] sm:$0xff] %vm34, 0.0
      %39 = vst.msk [vmem:[#allocation2 + $0x20] sm:$0xff] %vm34, 0.0
      %40 = vst.msk [vmem:[#allocation2 + $0x28] sm:$0xff] %vm34, 0.0
      %41 = vst.msk [vmem:[#allocation2 + $0x30] sm:$0xff] %vm34, 0.0
      %42 = vst.msk [vmem:[#allocation2 + $0x38] sm:$0xff] %vm34, 0.0
      %43 = vst.msk [vmem:[#allocation2 + $0x40] sm:$0xff] %vm34, 0.0
      %44 = vst.msk [vmem:[#allocation2 + $0x48] sm:$0xff] %vm34, 0.0
      %45 = vst.msk [vmem:[#allocation2 + $0x50] sm:$0xff] %vm34, 0.0
      %46 = vst.msk [vmem:[#allocation2 + $0x58] sm:$0xff] %vm34, 0.0
      %47 = vst.msk [vmem:[#allocation2 + $0x60] sm:$0xff] %vm34, 0.0
      %48 = vst.msk [vmem:[#allocation2 + $0x68] sm:$0xff] %vm34, 0.0
      %49 = vst.msk [vmem:[#allocation2 + $0x70] sm:$0xff] %vm34, 0.0
      %50 = vst.msk [vmem:[#allocation2 + $0x78] sm:$0xff] %vm34, 0.0
      %51 = vst.msk [vmem:[#allocation2 + $0x80] sm:$0xff] %vm34, 0.0
      %52 = vst.msk [vmem:[#allocation2 + $0x88] sm:$0xff] %vm34, 0.0
      %53 = vst.msk [vmem:[#allocation2 + $0x90] sm:$0xff] %vm34, 0.0
      %54 = vst.msk [vmem:[#allocation2 + $0x98] sm:$0xff] %vm34, 0.0
      %55 = vst.msk [vmem:[#allocation2 + $0xa0] sm:$0xff] %vm34, 0.0
      %56 = vst.msk [vmem:[#allocation2 + $0xa8] sm:$0xff] %vm34, 0.0
      %57 = vst.msk [vmem:[#allocation2 + $0xb0] sm:$0xff] %vm34, 0.0
      %58 = vst.msk [vmem:[#allocation2 + $0xb8] sm:$0xff] %vm34, 0.0
      %59 = vst.msk [vmem:[#allocation2 + $0xc0] sm:$0xff] %vm34, 0.0
      %60 = vst.msk [vmem:[#allocation2 + $0xc8] sm:$0xff] %vm34, 0.0
      %61 = vst.msk [vmem:[#allocation2 + $0xd0] sm:$0xff] %vm34, 0.0
      %62 = vst.msk [vmem:[#allocation2 + $0xd8] sm:$0xff] %vm34, 0.0
      %63 = vst.msk [vmem:[#allocation2 + $0xe0] sm:$0xff] %vm34, 0.0
      %64 = vst.msk [vmem:[#allocation2 + $0xe8] sm:$0xff] %vm34, 0.0
      %65 = vst.msk [vmem:[#allocation2 + $0xf0] sm:$0xff] %vm34, 0.0
      %66 = vst.msk [vmem:[#allocation2 + $0xf8] sm:$0xff] %vm34, 0.0
      %67 = vst.msk [vmem:[#allocation2 + $0x100] sm:$0xff] %vm34, 0.0
      %68 = vst.msk [vmem:[#allocation2 + $0x108] sm:$0xff] %vm34, 0.0
      %69 = vst.msk [vmem:[#allocation2 + $0x110] sm:$0xff] %vm34, 0.0
      %70 = vst.msk [vmem:[#allocation2 + $0x118] sm:$0xff] %vm34, 0.0
      %71 = vst.msk [vmem:[#allocation2 + $0x120] sm:$0xff] %vm34, 0.0
      %72 = vst.msk [vmem:[#allocation2 + $0x128] sm:$0xff] %vm34, 0.0
      %73 = vst.msk [vmem:[#allocation2 + $0x130] sm:$0xff] %vm34, 0.0
      %74 = vst.msk [vmem:[#allocation2 + $0x138] sm:$0xff] %vm34, 0.0
      %75 = vst.msk [vmem:[#allocation2 + $0x140] sm:$0xff] %vm34, 0.0
      %76 = vst.msk [vmem:[#allocation2 + $0x148] sm:$0xff] %vm34, 0.0
      %77 = vst.msk [vmem:[#allocation2 + $0x150] sm:$0xff] %vm34, 0.0
      %78 = vst.msk [vmem:[#allocation2 + $0x158] sm:$0xff] %vm34, 0.0
      %79 = vst.msk [vmem:[#allocation2 + $0x160] sm:$0xff] %vm34, 0.0
      %80 = vst.msk [vmem:[#allocation2 + $0x168] sm:$0xff] %vm34, 0.0
      %81 = vst.msk [vmem:[#allocation2 + $0x170] sm:$0xff] %vm34, 0.0
      %82 = vst.msk [vmem:[#allocation2 + $0x178] sm:$0xff] %vm34, 0.0
      %83 = vst.msk [vmem:[#allocation2 + $0x180] sm:$0xff] %vm34, 0.0
      %84 = vst.msk [vmem:[#allocation2 + $0x188] sm:$0xff] %vm34, 0.0
      %85 = vst.msk [vmem:[#allocation2 + $0x190] sm:$0xff] %vm34, 0.0
      %86 = vst.msk [vmem:[#allocation2 + $0x198] sm:$0xff] %vm34, 0.0
      %87 = vst.msk [vmem:[#allocation2 + $0x1a0] sm:$0xff] %vm34, 0.0
      %88 = vst.msk [vmem:[#allocation2 + $0x1a8] sm:$0xff] %vm34, 0.0
      %89 = vst.msk [vmem:[#allocation2 + $0x1b0] sm:$0xff] %vm34, 0.0
      %90 = vst.msk [vmem:[#allocation2 + $0x1b8] sm:$0xff] %vm34, 0.0
      %91 = vst.msk [vmem:[#allocation2 + $0x1c0] sm:$0xff] %vm34, 0.0
      %92 = vst.msk [vmem:[#allocation2 + $0x1c8] sm:$0xff] %vm34, 0.0
      %93 = vst.msk [vmem:[#allocation2 + $0x1d0] sm:$0xff] %vm34, 0.0
      %94 = vst.msk [vmem:[#allocation2 + $0x1d8] sm:$0xff] %vm34, 0.0
      %95 = vst.msk [vmem:[#allocation2 + $0x1e0] sm:$0xff] %vm34, 0.0
      %96 = vst.msk [vmem:[#allocation2 + $0x1e8] sm:$0xff] %vm34, 0.0
      %97 = vst.msk [vmem:[#allocation2 + $0x1f0] sm:$0xff] %vm34, 0.0
      %98 = vst.msk [vmem:[#allocation2 + $0x1f8] sm:$0xff] %vm34, 0.0
    $region21: #{tpu_custom_call.1} parent=1 // pred_fallthru
      _
    %v99 = vld [vmem:[#allocation2] sm:$0xff]
    %v100 = vld [vmem:[#allocation2 + $0x8] sm:$0xff]
    %v101 = vld [vmem:[#allocation2 + $0x10] sm:$0xff]
    %v102 = vld [vmem:[#allocation2 + $0x18] sm:$0xff]
    %v103 = vld [vmem:[#allocation2 + $0x20] sm:$0xff]
    %v104 = vld [vmem:[#allocation2 + $0x28] sm:$0xff]
    %v105 = vld [vmem:[#allocation2 + $0x30] sm:$0xff]
    %v106 = vld [vmem:[#allocation2 + $0x38] sm:$0xff]
    %v107 = vld [vmem:[#allocation2 + $0x40] sm:$0xff]
    %v108 = vld [vmem:[#allocation2 + $0x48] sm:$0xff]
    %v109 = vld [vmem:[#allocation2 + $0x50] sm:$0xff]
    %v110 = vld [vmem:[#allocation2 + $0x58] sm:$0xff]
    %v111 = vld [vmem:[#allocation2 + $0x60] sm:$0xff]
    %v112 = vld [vmem:[#allocation2 + $0x68] sm:$0xff]
    %v113 = vld [vmem:[#allocation2 + $0x70] sm:$0xff]
    %v114 = vld [vmem:[#allocation2 + $0x78] sm:$0xff]
    %v115 = vld [vmem:[#allocation2 + $0x80] sm:$0xff]
    %v116 = vld [vmem:[#allocation2 + $0x88] sm:$0xff]
    %v117 = vld [vmem:[#allocation2 + $0x90] sm:$0xff]
    %v118 = vld [vmem:[#allocation2 + $0x98] sm:$0xff]
    %v119 = vld [vmem:[#allocation2 + $0xa0] sm:$0xff]
    %v120 = vld [vmem:[#allocation2 + $0xa8] sm:$0xff]
    %v121 = vld [vmem:[#allocation2 + $0xb0] sm:$0xff]
    %v122 = vld [vmem:[#allocation2 + $0xb8] sm:$0xff]
    %v123 = vld [vmem:[#allocation2 + $0xc0] sm:$0xff]
    %v124 = vld [vmem:[#allocation2 + $0xc8] sm:$0xff]
    %v125 = vld [vmem:[#allocation2 + $0xd0] sm:$0xff]
    %v126 = vld [vmem:[#allocation2 + $0xd8] sm:$0xff]
    %v127 = vld [vmem:[#allocation2 + $0xe0] sm:$0xff]
    %v128 = vld [vmem:[#allocation2 + $0xe8] sm:$0xff]
    %v129 = vld [vmem:[#allocation2 + $0xf0] sm:$0xff]
    %v130 = vld [vmem:[#allocation2 + $0xf8] sm:$0xff]
    %v131 = vld [vmem:[#allocation2 + $0x100] sm:$0xff]
    %v132 = vld [vmem:[#allocation2 + $0x108] sm:$0xff]
    %v133 = vld [vmem:[#allocation2 + $0x110] sm:$0xff]
    %v134 = vld [vmem:[#allocation2 + $0x118] sm:$0xff]
    %v135 = vld [vmem:[#allocation2 + $0x120] sm:$0xff]
    %v136 = vld [vmem:[#allocation2 + $0x128] sm:$0xff]
    %v137 = vld [vmem:[#allocation2 + $0x130] sm:$0xff]
    %v138 = vld [vmem:[#allocation2 + $0x138] sm:$0xff]
    %v139 = vld [vmem:[#allocation2 + $0x140] sm:$0xff]
    %v140 = vld [vmem:[#allocation2 + $0x148] sm:$0xff]
    %v141 = vld [vmem:[#allocation2 + $0x150] sm:$0xff]
    %v142 = vld [vmem:[#allocation2 + $0x158] sm:$0xff]
    %v143 = vld [vmem:[#allocation2 + $0x160] sm:$0xff]
    %v144 = vld [vmem:[#allocation2 + $0x168] sm:$0xff]
    %v145 = vld [vmem:[#allocation2 + $0x170] sm:$0xff]
    %v146 = vld [vmem:[#allocation2 + $0x178] sm:$0xff]
    %v147 = vld [vmem:[#allocation2 + $0x180] sm:$0xff]
    %v148 = vld [vmem:[#allocation2 + $0x188] sm:$0xff]
    %v149 = vld [vmem:[#allocation2 + $0x190] sm:$0xff]
    %v150 = vld [vmem:[#allocation2 + $0x198] sm:$0xff]
    %v151 = vld [vmem:[#allocation2 + $0x1a0] sm:$0xff]
    %v152 = vld [vmem:[#allocation2 + $0x1a8] sm:$0xff]
    %v153 = vld [vmem:[#allocation2 + $0x1b0] sm:$0xff]
    %v154 = vld [vmem:[#allocation2 + $0x1b8] sm:$0xff]
    %v155 = vld [vmem:[#allocation2 + $0x1c0] sm:$0xff]
    %v156 = vld [vmem:[#allocation2 + $0x1c8] sm:$0xff]
    %v157 = vld [vmem:[#allocation2 + $0x1d0] sm:$0xff]
    %v158 = vld [vmem:[#allocation2 + $0x1d8] sm:$0xff]
    %v159 = vld [vmem:[#allocation2 + $0x1e0] sm:$0xff]
    %v160 = vld [vmem:[#allocation2 + $0x1e8] sm:$0xff]
    %v161 = vld [vmem:[#allocation2 + $0x1f0] sm:$0xff]
    %v162 = vld [vmem:[#allocation2 + $0x1f8] sm:$0xff]
    %v163 = vld [vmem:[#allocation3] sm:$0xf]
    %v164 = vld [vmem:[#allocation3 + $0x4] sm:$0xf]
    %v165 = vld [vmem:[#allocation3 + $0x8] sm:$0xf]
    %v166 = vld [vmem:[#allocation3 + $0xc] sm:$0xf]
    %v167 = vld [vmem:[#allocation3 + $0x10] sm:$0xf]
    %v168 = vld [vmem:[#allocation3 + $0x14] sm:$0xf]
    %v169 = vld [vmem:[#allocation3 + $0x18] sm:$0xf]
    %v170 = vld [vmem:[#allocation3 + $0x1c] sm:$0xf]
    %v171 = vld [vmem:[#allocation3 + $0x20] sm:$0xf]
    %v172 = vld [vmem:[#allocation3 + $0x24] sm:$0xf]
    %v173 = vld [vmem:[#allocation3 + $0x28] sm:$0xf]
    %v174 = vld [vmem:[#allocation3 + $0x2c] sm:$0xf]
    %v175 = vld [vmem:[#allocation3 + $0x30] sm:$0xf]
    %v176 = vld [vmem:[#allocation3 + $0x34] sm:$0xf]
    %v177 = vld [vmem:[#allocation3 + $0x38] sm:$0xf]
    %v178 = vld [vmem:[#allocation3 + $0x3c] sm:$0xf]
    %v179 = vld [vmem:[#allocation3 + $0x40] sm:$0xf]
    %v180 = vld [vmem:[#allocation3 + $0x44] sm:$0xf]
    %v181 = vld [vmem:[#allocation3 + $0x48] sm:$0xf]
    %v182 = vld [vmem:[#allocation3 + $0x4c] sm:$0xf]
    %v183 = vld [vmem:[#allocation3 + $0x50] sm:$0xf]
    %v184 = vld [vmem:[#allocation3 + $0x54] sm:$0xf]
    %v185 = vld [vmem:[#allocation3 + $0x58] sm:$0xf]
    %v186 = vld [vmem:[#allocation3 + $0x5c] sm:$0xf]
    %v187 = vld [vmem:[#allocation3 + $0x60] sm:$0xf]
    %v188 = vld [vmem:[#allocation3 + $0x64] sm:$0xf]
    %v189 = vld [vmem:[#allocation3 + $0x68] sm:$0xf]
    %v190 = vld [vmem:[#allocation3 + $0x6c] sm:$0xf]
    %v191 = vld [vmem:[#allocation3 + $0x70] sm:$0xf]
    %v192 = vld [vmem:[#allocation3 + $0x74] sm:$0xf]
    %v193 = vld [vmem:[#allocation3 + $0x78] sm:$0xf]
    %v194 = vld [vmem:[#allocation3 + $0x7c] sm:$0xf]
    %v195 = vld [vmem:[#allocation3 + $0x80] sm:$0xf]
    %v196 = vld [vmem:[#allocation3 + $0x84] sm:$0xf]
    %v197 = vld [vmem:[#allocation3 + $0x88] sm:$0xf]
    %v198 = vld [vmem:[#allocation3 + $0x8c] sm:$0xf]
    %v199 = vld [vmem:[#allocation3 + $0x90] sm:$0xf]
    %v200 = vld [vmem:[#allocation3 + $0x94] sm:$0xf]
    %v201 = vld [vmem:[#allocation3 + $0x98] sm:$0xf]
    %v202 = vld [vmem:[#allocation3 + $0x9c] sm:$0xf]
    %v203 = vld [vmem:[#allocation3 + $0xa0] sm:$0xf]
    %v204 = vld [vmem:[#allocation3 + $0xa4] sm:$0xf]
    %v205 = vld [vmem:[#allocation3 + $0xa8] sm:$0xf]
    %v206 = vld [vmem:[#allocation3 + $0xac] sm:$0xf]
    %v207 = vld [vmem:[#allocation3 + $0xb0] sm:$0xf]
    %v208 = vld [vmem:[#allocation3 + $0xb4] sm:$0xf]
    %v209 = vld [vmem:[#allocation3 + $0xb8] sm:$0xf]
    %v210 = vld [vmem:[#allocation3 + $0xbc] sm:$0xf]
    %v211 = vld [vmem:[#allocation3 + $0xc0] sm:$0xf]
    %v212 = vld [vmem:[#allocation3 + $0xc4] sm:$0xf]
    %v213 = vld [vmem:[#allocation3 + $0xc8] sm:$0xf]
    %v214 = vld [vmem:[#allocation3 + $0xcc] sm:$0xf]
    %v215 = vld [vmem:[#allocation3 + $0xd0] sm:$0xf]
    %v216 = vld [vmem:[#allocation3 + $0xd4] sm:$0xf]
    %v217 = vld [vmem:[#allocation3 + $0xd8] sm:$0xf]
    %v218 = vld [vmem:[#allocation3 + $0xdc] sm:$0xf]
    %v219 = vld [vmem:[#allocation3 + $0xe0] sm:$0xf]
    %v220 = vld [vmem:[#allocation3 + $0xe4] sm:$0xf]
    %v221 = vld [vmem:[#allocation3 + $0xe8] sm:$0xf]
    %v222 = vld [vmem:[#allocation3 + $0xec] sm:$0xf]
    %v223 = vld [vmem:[#allocation3 + $0xf0] sm:$0xf]
    %v224 = vld [vmem:[#allocation3 + $0xf4] sm:$0xf]
    %v225 = vld [vmem:[#allocation3 + $0xf8] sm:$0xf]
    %v226 = vld [vmem:[#allocation3 + $0xfc] sm:$0xf]
    %v227 = vld [vmem:[%s1] sm:$0xf]
    %v228 = vld [vmem:[%s1 + $0x4] sm:$0xf]
    %v229 = vld [vmem:[%s1 + $0x8] sm:$0xf]
    %v230 = vld [vmem:[%s1 + $0xc] sm:$0xf]
    %v231 = vld [vmem:[%s1 + $0x10] sm:$0xf]
    %v232 = vld [vmem:[%s1 + $0x14] sm:$0xf]
    %v233 = vld [vmem:[%s1 + $0x18] sm:$0xf]
    %v234 = vld [vmem:[%s1 + $0x1c] sm:$0xf]
    %v235 = vld [vmem:[%s1 + $0x20] sm:$0xf]
    %v236 = vld [vmem:[%s1 + $0x24] sm:$0xf]
    %v237 = vld [vmem:[%s1 + $0x28] sm:$0xf]
    %v238 = vld [vmem:[%s1 + $0x2c] sm:$0xf]
    %v239 = vld [vmem:[%s1 + $0x30] sm:$0xf]
    %v240 = vld [vmem:[%s1 + $0x34] sm:$0xf]
    %v241 = vld [vmem:[%s1 + $0x38] sm:$0xf]
    %v242 = vld [vmem:[%s1 + $0x3c] sm:$0xf]
    %v307 = vunpack.c.l.b16 %v163
    %v308 = vunpack.c.l.b16 %v164
    %v309 = vunpack.c.l.b16 %v165
    %v310 = vunpack.c.l.b16 %v166
    %v311 = vunpack.c.l.b16 %v167
    %v312 = vunpack.c.l.b16 %v168
    %v313 = vunpack.c.l.b16 %v169
    %v314 = vunpack.c.l.b16 %v170
    %v315 = vunpack.c.l.b16 %v171
    %v316 = vunpack.c.l.b16 %v172
    %v317 = vunpack.c.l.b16 %v173
    %v318 = vunpack.c.l.b16 %v174
    %v319 = vunpack.c.l.b16 %v175
    %v320 = vunpack.c.l.b16 %v176
    %v321 = vunpack.c.l.b16 %v177
    %v322 = vunpack.c.l.b16 %v178
    %v323 = vunpack.c.l.b16 %v179
    %v324 = vunpack.c.l.b16 %v180
    %v325 = vunpack.c.l.b16 %v181
    %v326 = vunpack.c.l.b16 %v182
    %v327 = vunpack.c.l.b16 %v183
    %v328 = vunpack.c.l.b16 %v184
    %v329 = vunpack.c.l.b16 %v185
    %v330 = vunpack.c.l.b16 %v186
    %v331 = vunpack.c.l.b16 %v187
    %v332 = vunpack.c.l.b16 %v188
    %v333 = vunpack.c.l.b16 %v189
    %v334 = vunpack.c.l.b16 %v190
    %v335 = vunpack.c.l.b16 %v191
    %v336 = vunpack.c.l.b16 %v192
    %v337 = vunpack.c.l.b16 %v193
    %v338 = vunpack.c.l.b16 %v194
    %v339 = vunpack.c.l.b16 %v195
    %v340 = vunpack.c.l.b16 %v196
    %v341 = vunpack.c.l.b16 %v197
    %v342 = vunpack.c.l.b16 %v198
    %v343 = vunpack.c.l.b16 %v199
    %v344 = vunpack.c.l.b16 %v200
    %v345 = vunpack.c.l.b16 %v201
    %v346 = vunpack.c.l.b16 %v202
    %v347 = vunpack.c.l.b16 %v203
    %v348 = vunpack.c.l.b16 %v204
    %v349 = vunpack.c.l.b16 %v205
    %v350 = vunpack.c.l.b16 %v206
    %v351 = vunpack.c.l.b16 %v207
    %v352 = vunpack.c.l.b16 %v208
    %v353 = vunpack.c.l.b16 %v209
    %v354 = vunpack.c.l.b16 %v210
    %v355 = vunpack.c.l.b16 %v211
    %v356 = vunpack.c.l.b16 %v212
    %v357 = vunpack.c.l.b16 %v213
    %v358 = vunpack.c.l.b16 %v214
    %v359 = vunpack.c.l.b16 %v215
    %v360 = vunpack.c.l.b16 %v216
    %v361 = vunpack.c.l.b16 %v217
    %v362 = vunpack.c.l.b16 %v218
    %v363 = vunpack.c.l.b16 %v219
    %v364 = vunpack.c.l.b16 %v220
    %v365 = vunpack.c.l.b16 %v221
    %v366 = vunpack.c.l.b16 %v222
    %v367 = vunpack.c.l.b16 %v223
    %v368 = vunpack.c.l.b16 %v224
    %v369 = vunpack.c.l.b16 %v225
    %v370 = vunpack.c.l.b16 %v226
    %v371 = vpack.c.b16 %v308, %v307
    %v372 = vpack.c.b16 %v310, %v309
    %v373 = vpack.c.b16 %v312, %v311
    %v374 = vpack.c.b16 %v314, %v313
    %v375 = vpack.c.b16 %v316, %v315
    %v376 = vpack.c.b16 %v318, %v317
    %v377 = vpack.c.b16 %v320, %v319
    %v378 = vpack.c.b16 %v322, %v321
    %v379 = vpack.c.b16 %v324, %v323
    %v380 = vpack.c.b16 %v326, %v325
    %v381 = vpack.c.b16 %v328, %v327
    %v382 = vpack.c.b16 %v330, %v329
    %v383 = vpack.c.b16 %v332, %v331
    %v384 = vpack.c.b16 %v334, %v333
    %v385 = vpack.c.b16 %v336, %v335
    %v386 = vpack.c.b16 %v338, %v337
    %v387 = vpack.c.b16 %v340, %v339
    %v388 = vpack.c.b16 %v342, %v341
    %v389 = vpack.c.b16 %v344, %v343
    %v390 = vpack.c.b16 %v346, %v345
    %v391 = vpack.c.b16 %v348, %v347
    %v392 = vpack.c.b16 %v350, %v349
    %v393 = vpack.c.b16 %v352, %v351
    %v394 = vpack.c.b16 %v354, %v353
    %v395 = vpack.c.b16 %v356, %v355
    %v396 = vpack.c.b16 %v358, %v357
    %v397 = vpack.c.b16 %v360, %v359
    %v398 = vpack.c.b16 %v362, %v361
    %v399 = vpack.c.b16 %v364, %v363
    %v400 = vpack.c.b16 %v366, %v365
    %v401 = vpack.c.b16 %v368, %v367
    %v402 = vpack.c.b16 %v370, %v369
    %v451 = vunpack.c.l.b16 %v227
    %v452 = vunpack.c.l.b16 %v228
    %v453 = vunpack.c.l.b16 %v229
    %v454 = vunpack.c.l.b16 %v230
    %v455 = vunpack.c.l.b16 %v231
    %v456 = vunpack.c.l.b16 %v232
    %v457 = vunpack.c.l.b16 %v233
    %v458 = vunpack.c.l.b16 %v234
    %v459 = vunpack.c.l.b16 %v235
    %v460 = vunpack.c.l.b16 %v236
    %v461 = vunpack.c.l.b16 %v237
    %v462 = vunpack.c.l.b16 %v238
    %v463 = vunpack.c.l.b16 %v239
    %v464 = vunpack.c.l.b16 %v240
    %v465 = vunpack.c.l.b16 %v241
    %v466 = vunpack.c.l.b16 %v242
    %v467 = vpack.c.b16 %v452, %v451
    %v468 = vpack.c.b16 %v454, %v453
    %v469 = vpack.c.b16 %v456, %v455
    %v470 = vpack.c.b16 %v458, %v457
    %v471 = vpack.c.b16 %v460, %v459
    %v472 = vpack.c.b16 %v462, %v461
    %v473 = vpack.c.b16 %v464, %v463
    %v474 = vpack.c.b16 %v466, %v465
    %483 = vmatpush.bf16.msra.mxu0 %v474
    %484 = vmatpush.bf16.msra.mxu0 %v473
    %485 = vmatpush.bf16.msra.mxu0 %v472
    %486 = vmatpush.bf16.msra.mxu0 %v471
    %487 = vmatpush.bf16.msra.mxu0 %v470
    %488 = vmatpush.bf16.msra.mxu0 %v469
    %489 = vmatpush.bf16.msra.mxu0 %v468
    %490 = vmatpush.bf16.msra.mxu0 %v467
    %491 = vmatmul.bf16.gmra.mxu0 %v371
    %v492 = vpop.f32.mrf.mxu0
    %v493 = vadd.f32 0.0, %v492
    %v494 = vpop.f32.mrf.mxu0
    %v495 = vadd.f32 0.0, %v494
    %496 = vmatmul.bf16.gmra.mxu0 %v372
    %v497 = vpop.f32.mrf.mxu0
    %v498 = vadd.f32 0.0, %v497
    %v499 = vpop.f32.mrf.mxu0
    %v500 = vadd.f32 0.0, %v499
    %501 = vmatmul.bf16.gmra.mxu0 %v373
    %v502 = vpop.f32.mrf.mxu0
    %v503 = vadd.f32 0.0, %v502
    %v504 = vpop.f32.mrf.mxu0
    %v505 = vadd.f32 0.0, %v504
    %506 = vmatmul.bf16.gmra.mxu0 %v374
    %v507 = vpop.f32.mrf.mxu0
    %v508 = vadd.f32 0.0, %v507
    %v509 = vpop.f32.mrf.mxu0
    %v510 = vadd.f32 0.0, %v509
    %511 = vmatmul.bf16.gmra.mxu0 %v375
    %v512 = vpop.f32.mrf.mxu0
    %v513 = vadd.f32 0.0, %v512
    %v514 = vpop.f32.mrf.mxu0
    %v515 = vadd.f32 0.0, %v514
    %516 = vmatmul.bf16.gmra.mxu0 %v376
    %v517 = vpop.f32.mrf.mxu0
    %v518 = vadd.f32 0.0, %v517
    %v519 = vpop.f32.mrf.mxu0
    %v520 = vadd.f32 0.0, %v519
    %521 = vmatmul.bf16.gmra.mxu0 %v377
    %v522 = vpop.f32.mrf.mxu0
    %v523 = vadd.f32 0.0, %v522
    %v524 = vpop.f32.mrf.mxu0
    %v525 = vadd.f32 0.0, %v524
    %526 = vmatmul.bf16.gmra.mxu0 %v378
    %v527 = vpop.f32.mrf.mxu0
    %v528 = vadd.f32 0.0, %v527
    %v529 = vpop.f32.mrf.mxu0
    %v530 = vadd.f32 0.0, %v529
    %531 = vmatmul.bf16.gmra.mxu0 %v379
    %v532 = vpop.f32.mrf.mxu0
    %v533 = vadd.f32 0.0, %v532
    %v534 = vpop.f32.mrf.mxu0
    %v535 = vadd.f32 0.0, %v534
    %536 = vmatmul.bf16.gmra.mxu0 %v380
    %v537 = vpop.f32.mrf.mxu0
    %v538 = vadd.f32 0.0, %v537
    %v539 = vpop.f32.mrf.mxu0
    %v540 = vadd.f32 0.0, %v539
    %541 = vmatmul.bf16.gmra.mxu0 %v381
    %v542 = vpop.f32.mrf.mxu0
    %v543 = vadd.f32 0.0, %v542
    %v544 = vpop.f32.mrf.mxu0
    %v545 = vadd.f32 0.0, %v544
    %546 = vmatmul.bf16.gmra.mxu0 %v382
    %v547 = vpop.f32.mrf.mxu0
    %v548 = vadd.f32 0.0, %v547
    %v549 = vpop.f32.mrf.mxu0
    %v550 = vadd.f32 0.0, %v549
    %551 = vmatmul.bf16.gmra.mxu0 %v383
    %v552 = vpop.f32.mrf.mxu0
    %v553 = vadd.f32 0.0, %v552
    %v554 = vpop.f32.mrf.mxu0
    %v555 = vadd.f32 0.0, %v554
    %556 = vmatmul.bf16.gmra.mxu0 %v384
    %v557 = vpop.f32.mrf.mxu0
    %v558 = vadd.f32 0.0, %v557
    %v559 = vpop.f32.mrf.mxu0
    %v560 = vadd.f32 0.0, %v559
    %561 = vmatmul.bf16.gmra.mxu0 %v385
    %v562 = vpop.f32.mrf.mxu0
    %v563 = vadd.f32 0.0, %v562
    %v564 = vpop.f32.mrf.mxu0
    %v565 = vadd.f32 0.0, %v564
    %566 = vmatmul.bf16.gmra.mxu0 %v386
    %v567 = vpop.f32.mrf.mxu0
    %v568 = vadd.f32 0.0, %v567
    %v569 = vpop.f32.mrf.mxu0
    %v570 = vadd.f32 0.0, %v569
    %571 = vmatmul.bf16.gmra.mxu0 %v387
    %v572 = vpop.f32.mrf.mxu0
    %v573 = vadd.f32 0.0, %v572
    %v574 = vpop.f32.mrf.mxu0
    %v575 = vadd.f32 0.0, %v574
    %576 = vmatmul.bf16.gmra.mxu0 %v388
    %v577 = vpop.f32.mrf.mxu0
    %v578 = vadd.f32 0.0, %v577
    %v579 = vpop.f32.mrf.mxu0
    %v580 = vadd.f32 0.0, %v579
    %581 = vmatmul.bf16.gmra.mxu0 %v389
    %v582 = vpop.f32.mrf.mxu0
    %v583 = vadd.f32 0.0, %v582
    %v584 = vpop.f32.mrf.mxu0
    %v585 = vadd.f32 0.0, %v584
    %586 = vmatmul.bf16.gmra.mxu0 %v390
    %v587 = vpop.f32.mrf.mxu0
    %v588 = vadd.f32 0.0, %v587
    %v589 = vpop.f32.mrf.mxu0
    %v590 = vadd.f32 0.0, %v589
    %591 = vmatmul.bf16.gmra.mxu0 %v391
    %v592 = vpop.f32.mrf.mxu0
    %v593 = vadd.f32 0.0, %v592
    %v594 = vpop.f32.mrf.mxu0
    %v595 = vadd.f32 0.0, %v594
    %596 = vmatmul.bf16.gmra.mxu0 %v392
    %v597 = vpop.f32.mrf.mxu0
    %v598 = vadd.f32 0.0, %v597
    %v599 = vpop.f32.mrf.mxu0
    %v600 = vadd.f32 0.0, %v599
    %601 = vmatmul.bf16.gmra.mxu0 %v393
    %v602 = vpop.f32.mrf.mxu0
    %v603 = vadd.f32 0.0, %v602
    %v604 = vpop.f32.mrf.mxu0
    %v605 = vadd.f32 0.0, %v604
    %606 = vmatmul.bf16.gmra.mxu0 %v394
    %v607 = vpop.f32.mrf.mxu0
    %v608 = vadd.f32 0.0, %v607
    %v609 = vpop.f32.mrf.mxu0
    %v610 = vadd.f32 0.0, %v609
    %611 = vmatmul.bf16.gmra.mxu0 %v395
    %v612 = vpop.f32.mrf.mxu0
    %v613 = vadd.f32 0.0, %v612
    %v614 = vpop.f32.mrf.mxu0
    %v615 = vadd.f32 0.0, %v614
    %616 = vmatmul.bf16.gmra.mxu0 %v396
    %v617 = vpop.f32.mrf.mxu0
    %v618 = vadd.f32 0.0, %v617
    %v619 = vpop.f32.mrf.mxu0
    %v620 = vadd.f32 0.0, %v619
    %621 = vmatmul.bf16.gmra.mxu0 %v397
    %v622 = vpop.f32.mrf.mxu0
    %v623 = vadd.f32 0.0, %v622
    %v624 = vpop.f32.mrf.mxu0
    %v625 = vadd.f32 0.0, %v624
    %626 = vmatmul.bf16.gmra.mxu0 %v398
    %v627 = vpop.f32.mrf.mxu0
    %v628 = vadd.f32 0.0, %v627
    %v629 = vpop.f32.mrf.mxu0
    %v630 = vadd.f32 0.0, %v629
    %631 = vmatmul.bf16.gmra.mxu0 %v399
    %v632 = vpop.f32.mrf.mxu0
    %v633 = vadd.f32 0.0, %v632
    %v634 = vpop.f32.mrf.mxu0
    %v635 = vadd.f32 0.0, %v634
    %636 = vmatmul.bf16.gmra.mxu0 %v400
    %v637 = vpop.f32.mrf.mxu0
    %v638 = vadd.f32 0.0, %v637
    %v639 = vpop.f32.mrf.mxu0
    %v640 = vadd.f32 0.0, %v639
    %641 = vmatmul.bf16.gmra.mxu0 %v401
    %v642 = vpop.f32.mrf.mxu0
    %v643 = vadd.f32 0.0, %v642
    %v644 = vpop.f32.mrf.mxu0
    %v645 = vadd.f32 0.0, %v644
    %646 = vmatmul.bf16.gmra.mxu0 %v402
    %v647 = vpop.f32.mrf.mxu0
    %v648 = vadd.f32 0.0, %v647
    %v649 = vpop.f32.mrf.mxu0
    %v650 = vadd.f32 0.0, %v649
    %651 = vdwg.mxu0
    %v652 = vadd.f32 %v99, %v493
    %v653 = vadd.f32 %v100, %v495
    %v654 = vadd.f32 %v101, %v498
    %v655 = vadd.f32 %v102, %v500
    %v656 = vadd.f32 %v103, %v503
    %v657 = vadd.f32 %v104, %v505
    %v658 = vadd.f32 %v105, %v508
    %v659 = vadd.f32 %v106, %v510
    %v660 = vadd.f32 %v107, %v513
    %v661 = vadd.f32 %v108, %v515
    %v662 = vadd.f32 %v109, %v518
    %v663 = vadd.f32 %v110, %v520
    %v664 = vadd.f32 %v111, %v523
    %v665 = vadd.f32 %v112, %v525
    %v666 = vadd.f32 %v113, %v528
    %v667 = vadd.f32 %v114, %v530
    %v668 = vadd.f32 %v115, %v533
    %v669 = vadd.f32 %v116, %v535
    %v670 = vadd.f32 %v117, %v538
    %v671 = vadd.f32 %v118, %v540
    %v672 = vadd.f32 %v119, %v543
    %v673 = vadd.f32 %v120, %v545
    %v674 = vadd.f32 %v121, %v548
    %v675 = vadd.f32 %v122, %v550
    %v676 = vadd.f32 %v123, %v553
    %v677 = vadd.f32 %v124, %v555
    %v678 = vadd.f32 %v125, %v558
    %v679 = vadd.f32 %v126, %v560
    %v680 = vadd.f32 %v127, %v563
    %v681 = vadd.f32 %v128, %v565
    %v682 = vadd.f32 %v129, %v568
    %v683 = vadd.f32 %v130, %v570
    %v684 = vadd.f32 %v131, %v573
    %v685 = vadd.f32 %v132, %v575
    %v686 = vadd.f32 %v133, %v578
    %v687 = vadd.f32 %v134, %v580
    %v688 = vadd.f32 %v135, %v583
    %v689 = vadd.f32 %v136, %v585
    %v690 = vadd.f32 %v137, %v588
    %v691 = vadd.f32 %v138, %v590
    %v692 = vadd.f32 %v139, %v593
    %v693 = vadd.f32 %v140, %v595
    %v694 = vadd.f32 %v141, %v598
    %v695 = vadd.f32 %v142, %v600
    %v696 = vadd.f32 %v143, %v603
    %v697 = vadd.f32 %v144, %v605
    %v698 = vadd.f32 %v145, %v608
    %v699 = vadd.f32 %v146, %v610
    %v700 = vadd.f32 %v147, %v613
    %v701 = vadd.f32 %v148, %v615
    %v702 = vadd.f32 %v149, %v618
    %v703 = vadd.f32 %v150, %v620
    %v704 = vadd.f32 %v151, %v623
    %v705 = vadd.f32 %v152, %v625
    %v706 = vadd.f32 %v153, %v628
    %v707 = vadd.f32 %v154, %v630
    %v708 = vadd.f32 %v155, %v633
    %v709 = vadd.f32 %v156, %v635
    %v710 = vadd.f32 %v157, %v638
    %v711 = vadd.f32 %v158, %v640
    %v712 = vadd.f32 %v159, %v643
    %v713 = vadd.f32 %v160, %v645
    %v714 = vadd.f32 %v161, %v648
    %v715 = vadd.f32 %v162, %v650
    %vm716 = vcmask 130048
    %717 = vst.msk [vmem:[#allocation2] sm:$0xff] %vm716, %v652
    %718 = vst.msk [vmem:[#allocation2 + $0x8] sm:$0xff] %vm716, %v653
    %719 = vst.msk [vmem:[#allocation2 + $0x10] sm:$0xff] %vm716, %v654
    %720 = vst.msk [vmem:[#allocation2 + $0x18] sm:$0xff] %vm716, %v655
    %721 = vst.msk [vmem:[#allocation2 + $0x20] sm:$0xff] %vm716, %v656
    %722 = vst.msk [vmem:[#allocation2 + $0x28] sm:$0xff] %vm716, %v657
    %723 = vst.msk [vmem:[#allocation2 + $0x30] sm:$0xff] %vm716, %v658
    %724 = vst.msk [vmem:[#allocation2 + $0x38] sm:$0xff] %vm716, %v659
    %725 = vst.msk [vmem:[#allocation2 + $0x40] sm:$0xff] %vm716, %v660
    %726 = vst.msk [vmem:[#allocation2 + $0x48] sm:$0xff] %vm716, %v661
    %727 = vst.msk [vmem:[#allocation2 + $0x50] sm:$0xff] %vm716, %v662
    %728 = vst.msk [vmem:[#allocation2 + $0x58] sm:$0xff] %vm716, %v663
    %729 = vst.msk [vmem:[#allocation2 + $0x60] sm:$0xff] %vm716, %v664
    %730 = vst.msk [vmem:[#allocation2 + $0x68] sm:$0xff] %vm716, %v665
    %731 = vst.msk [vmem:[#allocation2 + $0x70] sm:$0xff] %vm716, %v666
    %732 = vst.msk [vmem:[#allocation2 + $0x78] sm:$0xff] %vm716, %v667
    %733 = vst.msk [vmem:[#allocation2 + $0x80] sm:$0xff] %vm716, %v668
    %734 = vst.msk [vmem:[#allocation2 + $0x88] sm:$0xff] %vm716, %v669
    %735 = vst.msk [vmem:[#allocation2 + $0x90] sm:$0xff] %vm716, %v670
    %736 = vst.msk [vmem:[#allocation2 + $0x98] sm:$0xff] %vm716, %v671
    %737 = vst.msk [vmem:[#allocation2 + $0xa0] sm:$0xff] %vm716, %v672
    %738 = vst.msk [vmem:[#allocation2 + $0xa8] sm:$0xff] %vm716, %v673
    %739 = vst.msk [vmem:[#allocation2 + $0xb0] sm:$0xff] %vm716, %v674
    %740 = vst.msk [vmem:[#allocation2 + $0xb8] sm:$0xff] %vm716, %v675
    %741 = vst.msk [vmem:[#allocation2 + $0xc0] sm:$0xff] %vm716, %v676
    %742 = vst.msk [vmem:[#allocation2 + $0xc8] sm:$0xff] %vm716, %v677
    %743 = vst.msk [vmem:[#allocation2 + $0xd0] sm:$0xff] %vm716, %v678
    %744 = vst.msk [vmem:[#allocation2 + $0xd8] sm:$0xff] %vm716, %v679
    %745 = vst.msk [vmem:[#allocation2 + $0xe0] sm:$0xff] %vm716, %v680
    %746 = vst.msk [vmem:[#allocation2 + $0xe8] sm:$0xff] %vm716, %v681
    %747 = vst.msk [vmem:[#allocation2 + $0xf0] sm:$0xff] %vm716, %v682
    %748 = vst.msk [vmem:[#allocation2 + $0xf8] sm:$0xff] %vm716, %v683
    %749 = vst.msk [vmem:[#allocation2 + $0x100] sm:$0xff] %vm716, %v684
    %750 = vst.msk [vmem:[#allocation2 + $0x108] sm:$0xff] %vm716, %v685
    %751 = vst.msk [vmem:[#allocation2 + $0x110] sm:$0xff] %vm716, %v686
    %752 = vst.msk [vmem:[#allocation2 + $0x118] sm:$0xff] %vm716, %v687
    %753 = vst.msk [vmem:[#allocation2 + $0x120] sm:$0xff] %vm716, %v688
    %754 = vst.msk [vmem:[#allocation2 + $0x128] sm:$0xff] %vm716, %v689
    %755 = vst.msk [vmem:[#allocation2 + $0x130] sm:$0xff] %vm716, %v690
    %756 = vst.msk [vmem:[#allocation2 + $0x138] sm:$0xff] %vm716, %v691
    %757 = vst.msk [vmem:[#allocation2 + $0x140] sm:$0xff] %vm716, %v692
    %758 = vst.msk [vmem:[#allocation2 + $0x148] sm:$0xff] %vm716, %v693
    %759 = vst.msk [vmem:[#allocation2 + $0x150] sm:$0xff] %vm716, %v694
    %760 = vst.msk [vmem:[#allocation2 + $0x158] sm:$0xff] %vm716, %v695
    %761 = vst.msk [vmem:[#allocation2 + $0x160] sm:$0xff] %vm716, %v696
    %762 = vst.msk [vmem:[#allocation2 + $0x168] sm:$0xff] %vm716, %v697
    %763 = vst.msk [vmem:[#allocation2 + $0x170] sm:$0xff] %vm716, %v698
    %764 = vst.msk [vmem:[#allocation2 + $0x178] sm:$0xff] %vm716, %v699
    %765 = vst.msk [vmem:[#allocation2 + $0x180] sm:$0xff] %vm716, %v700
    %766 = vst.msk [vmem:[#allocation2 + $0x188] sm:$0xff] %vm716, %v701
    %767 = vst.msk [vmem:[#allocation2 + $0x190] sm:$0xff] %vm716, %v702
    %768 = vst.msk [vmem:[#allocation2 + $0x198] sm:$0xff] %vm716, %v703
    %769 = vst.msk [vmem:[#allocation2 + $0x1a0] sm:$0xff] %vm716, %v704
    %770 = vst.msk [vmem:[#allocation2 + $0x1a8] sm:$0xff] %vm716, %v705
    %771 = vst.msk [vmem:[#allocation2 + $0x1b0] sm:$0xff] %vm716, %v706
    %772 = vst.msk [vmem:[#allocation2 + $0x1b8] sm:$0xff] %vm716, %v707
    %773 = vst.msk [vmem:[#allocation2 + $0x1c0] sm:$0xff] %vm716, %v708
    %774 = vst.msk [vmem:[#allocation2 + $0x1c8] sm:$0xff] %vm716, %v709
    %775 = vst.msk [vmem:[#allocation2 + $0x1d0] sm:$0xff] %vm716, %v710
    %776 = vst.msk [vmem:[#allocation2 + $0x1d8] sm:$0xff] %vm716, %v711
    %777 = vst.msk [vmem:[#allocation2 + $0x1e0] sm:$0xff] %vm716, %v712
    %778 = vst.msk [vmem:[#allocation2 + $0x1e8] sm:$0xff] %vm716, %v713
    %779 = vst.msk [vmem:[#allocation2 + $0x1f0] sm:$0xff] %vm716, %v714
    %780 = vst.msk [vmem:[#allocation2 + $0x1f8] sm:$0xff] %vm716, %v715
    // Predicated region
    $region22: #{tpu_custom_call.1} parent=1 // pred_check
      %p781 = pneg %p30
    $region23: #{tpu_custom_call.1} parent=1 // pred_check_branch
      %783 = sbr.rel (%p781) target = $region25
    $region24: #{tpu_custom_call.1} parent=1 // pred_region
      %v784 = vld [vmem:[#allocation2] sm:$0xff]
      %v785 = vld [vmem:[#allocation2 + $0x8] sm:$0xff]
      %v786 = vld [vmem:[#allocation2 + $0x10] sm:$0xff]
      %v787 = vld [vmem:[#allocation2 + $0x18] sm:$0xff]
      %v788 = vld [vmem:[#allocation2 + $0x20] sm:$0xff]
      %v789 = vld [vmem:[#allocation2 + $0x28] sm:$0xff]
      %v790 = vld [vmem:[#allocation2 + $0x30] sm:$0xff]
      %v791 = vld [vmem:[#allocation2 + $0x38] sm:$0xff]
      %v792 = vld [vmem:[#allocation2 + $0x40] sm:$0xff]
      %v793 = vld [vmem:[#allocation2 + $0x48] sm:$0xff]
      %v794 = vld [vmem:[#allocation2 + $0x50] sm:$0xff]
      %v795 = vld [vmem:[#allocation2 + $0x58] sm:$0xff]
      %v796 = vld [vmem:[#allocation2 + $0x60] sm:$0xff]
      %v797 = vld [vmem:[#allocation2 + $0x68] sm:$0xff]
      %v798 = vld [vmem:[#allocation2 + $0x70] sm:$0xff]
      %v799 = vld [vmem:[#allocation2 + $0x78] sm:$0xff]
      %v800 = vld [vmem:[#allocation2 + $0x80] sm:$0xff]
      %v801 = vld [vmem:[#allocation2 + $0x88] sm:$0xff]
      %v802 = vld [vmem:[#allocation2 + $0x90] sm:$0xff]
      %v803 = vld [vmem:[#allocation2 + $0x98] sm:$0xff]
      %v804 = vld [vmem:[#allocation2 + $0xa0] sm:$0xff]
      %v805 = vld [vmem:[#allocation2 + $0xa8] sm:$0xff]
      %v806 = vld [vmem:[#allocation2 + $0xb0] sm:$0xff]
      %v807 = vld [vmem:[#allocation2 + $0xb8] sm:$0xff]
      %v808 = vld [vmem:[#allocation2 + $0xc0] sm:$0xff]
      %v809 = vld [vmem:[#allocation2 + $0xc8] sm:$0xff]
      %v810 = vld [vmem:[#allocation2 + $0xd0] sm:$0xff]
      %v811 = vld [vmem:[#allocation2 + $0xd8] sm:$0xff]
      %v812 = vld [vmem:[#allocation2 + $0xe0] sm:$0xff]
      %v813 = vld [vmem:[#allocation2 + $0xe8] sm:$0xff]
      %v814 = vld [vmem:[#allocation2 + $0xf0] sm:$0xff]
      %v815 = vld [vmem:[#allocation2 + $0xf8] sm:$0xff]
      %v816 = vld [vmem:[#allocation2 + $0x100] sm:$0xff]
      %v817 = vld [vmem:[#allocation2 + $0x108] sm:$0xff]
      %v818 = vld [vmem:[#allocation2 + $0x110] sm:$0xff]
      %v819 = vld [vmem:[#allocation2 + $0x118] sm:$0xff]
      %v820 = vld [vmem:[#allocation2 + $0x120] sm:$0xff]
      %v821 = vld [vmem:[#allocation2 + $0x128] sm:$0xff]
      %v822 = vld [vmem:[#allocation2 + $0x130] sm:$0xff]
      %v823 = vld [vmem:[#allocation2 + $0x138] sm:$0xff]
      %v824 = vld [vmem:[#allocation2 + $0x140] sm:$0xff]
      %v825 = vld [vmem:[#allocation2 + $0x148] sm:$0xff]
      %v826 = vld [vmem:[#allocation2 + $0x150] sm:$0xff]
      %v827 = vld [vmem:[#allocation2 + $0x158] sm:$0xff]
      %v828 = vld [vmem:[#allocation2 + $0x160] sm:$0xff]
      %v829 = vld [vmem:[#allocation2 + $0x168] sm:$0xff]
      %v830 = vld [vmem:[#allocation2 + $0x170] sm:$0xff]
      %v831 = vld [vmem:[#allocation2 + $0x178] sm:$0xff]
      %v832 = vld [vmem:[#allocation2 + $0x180] sm:$0xff]
      %v833 = vld [vmem:[#allocation2 + $0x188] sm:$0xff]
      %v834 = vld [vmem:[#allocation2 + $0x190] sm:$0xff]
      %v835 = vld [vmem:[#allocation2 + $0x198] sm:$0xff]
      %v836 = vld [vmem:[#allocation2 + $0x1a0] sm:$0xff]
      %v837 = vld [vmem:[#allocation2 + $0x1a8] sm:$0xff]
      %v838 = vld [vmem:[#allocation2 + $0x1b0] sm:$0xff]
      %v839 = vld [vmem:[#allocation2 + $0x1b8] sm:$0xff]
      %v840 = vld [vmem:[#allocation2 + $0x1c0] sm:$0xff]
      %v841 = vld [vmem:[#allocation2 + $0x1c8] sm:$0xff]
      %v842 = vld [vmem:[#allocation2 + $0x1d0] sm:$0xff]
      %v843 = vld [vmem:[#allocation2 + $0x1d8] sm:$0xff]
      %v844 = vld [vmem:[#allocation2 + $0x1e0] sm:$0xff]
      %v845 = vld [vmem:[#allocation2 + $0x1e8] sm:$0xff]
      %v846 = vld [vmem:[#allocation2 + $0x1f0] sm:$0xff]
      %v847 = vld [vmem:[#allocation2 + $0x1f8] sm:$0xff]
      %v848 = vld [vmem:[%s2] sm:$0x1]
      %v850 = vperm.slane %v848, 0
      %v852 = vadd.f32 %v784, %v850
      %v853 = vadd.f32 %v785, %v850
      %v854 = vadd.f32 %v786, %v850
      %v855 = vadd.f32 %v787, %v850
      %v856 = vadd.f32 %v788, %v850
      %v857 = vadd.f32 %v789, %v850
      %v858 = vadd.f32 %v790, %v850
      %v859 = vadd.f32 %v791, %v850
      %v860 = vadd.f32 %v792, %v850
      %v861 = vadd.f32 %v793, %v850
      %v862 = vadd.f32 %v794, %v850
      %v863 = vadd.f32 %v795, %v850
      %v864 = vadd.f32 %v796, %v850
      %v865 = vadd.f32 %v797, %v850
      %v866 = vadd.f32 %v798, %v850
      %v867 = vadd.f32 %v799, %v850
      %v868 = vadd.f32 %v800, %v850
      %v869 = vadd.f32 %v801, %v850
      %v870 = vadd.f32 %v802, %v850
      %v871 = vadd.f32 %v803, %v850
      %v872 = vadd.f32 %v804, %v850
      %v873 = vadd.f32 %v805, %v850
      %v874 = vadd.f32 %v806, %v850
      %v875 = vadd.f32 %v807, %v850
      %v876 = vadd.f32 %v808, %v850
      %v877 = vadd.f32 %v809, %v850
      %v878 = vadd.f32 %v810, %v850
      %v879 = vadd.f32 %v811, %v850
      %v880 = vadd.f32 %v812, %v850
      %v881 = vadd.f32 %v813, %v850
      %v882 = vadd.f32 %v814, %v850
      %v883 = vadd.f32 %v815, %v850
      %v884 = vadd.f32 %v816, %v850
      %v885 = vadd.f32 %v817, %v850
      %v886 = vadd.f32 %v818, %v850
      %v887 = vadd.f32 %v819, %v850
      %v888 = vadd.f32 %v820, %v850
      %v889 = vadd.f32 %v821, %v850
      %v890 = vadd.f32 %v822, %v850
      %v891 = vadd.f32 %v823, %v850
      %v892 = vadd.f32 %v824, %v850
      %v893 = vadd.f32 %v825, %v850
      %v894 = vadd.f32 %v826, %v850
      %v895 = vadd.f32 %v827, %v850
      %v896 = vadd.f32 %v828, %v850
      %v897 = vadd.f32 %v829, %v850
      %v898 = vadd.f32 %v830, %v850
      %v899 = vadd.f32 %v831, %v850
      %v900 = vadd.f32 %v832, %v850
      %v901 = vadd.f32 %v833, %v850
      %v902 = vadd.f32 %v834, %v850
      %v903 = vadd.f32 %v835, %v850
      %v904 = vadd.f32 %v836, %v850
      %v905 = vadd.f32 %v837, %v850
      %v906 = vadd.f32 %v838, %v850
      %v907 = vadd.f32 %v839, %v850
      %v908 = vadd.f32 %v840, %v850
      %v909 = vadd.f32 %v841, %v850
      %v910 = vadd.f32 %v842, %v850
      %v911 = vadd.f32 %v843, %v850
      %v912 = vadd.f32 %v844, %v850
      %v913 = vadd.f32 %v845, %v850
      %v914 = vadd.f32 %v846, %v850
      %v915 = vadd.f32 %v847, %v850
      %v916 = vmax.f32 %v852, 0.0
      %v917 = vmax.f32 %v853, 0.0
      %v918 = vmax.f32 %v854, 0.0
      %v919 = vmax.f32 %v855, 0.0
      %v920 = vmax.f32 %v856, 0.0
      %v921 = vmax.f32 %v857, 0.0
      %v922 = vmax.f32 %v858, 0.0
      %v923 = vmax.f32 %v859, 0.0
      %v924 = vmax.f32 %v860, 0.0
      %v925 = vmax.f32 %v861, 0.0
      %v926 = vmax.f32 %v862, 0.0
      %v927 = vmax.f32 %v863, 0.0
      %v928 = vmax.f32 %v864, 0.0
      %v929 = vmax.f32 %v865, 0.0
      %v930 = vmax.f32 %v866, 0.0
      %v931 = vmax.f32 %v867, 0.0
      %v932 = vmax.f32 %v868, 0.0
      %v933 = vmax.f32 %v869, 0.0
      %v934 = vmax.f32 %v870, 0.0
      %v935 = vmax.f32 %v871, 0.0
      %v936 = vmax.f32 %v872, 0.0
      %v937 = vmax.f32 %v873, 0.0
      %v938 = vmax.f32 %v874, 0.0
      %v939 = vmax.f32 %v875, 0.0
      %v940 = vmax.f32 %v876, 0.0
      %v941 = vmax.f32 %v877, 0.0
      %v942 = vmax.f32 %v878, 0.0
      %v943 = vmax.f32 %v879, 0.0
      %v944 = vmax.f32 %v880, 0.0
      %v945 = vmax.f32 %v881, 0.0
      %v946 = vmax.f32 %v882, 0.0
      %v947 = vmax.f32 %v883, 0.0
      %v948 = vmax.f32 %v884, 0.0
      %v949 = vmax.f32 %v885, 0.0
      %v950 = vmax.f32 %v886, 0.0
      %v951 = vmax.f32 %v887, 0.0
      %v952 = vmax.f32 %v888, 0.0
      %v953 = vmax.f32 %v889, 0.0
      %v954 = vmax.f32 %v890, 0.0
      %v955 = vmax.f32 %v891, 0.0
      %v956 = vmax.f32 %v892, 0.0
      %v957 = vmax.f32 %v893, 0.0
      %v958 = vmax.f32 %v894, 0.0
      %v959 = vmax.f32 %v895, 0.0
      %v960 = vmax.f32 %v896, 0.0
      %v961 = vmax.f32 %v897, 0.0
      %v962 = vmax.f32 %v898, 0.0
      %v963 = vmax.f32 %v899, 0.0
      %v964 = vmax.f32 %v900, 0.0
      %v965 = vmax.f32 %v901, 0.0
      %v966 = vmax.f32 %v902, 0.0
      %v967 = vmax.f32 %v903, 0.0
      %v968 = vmax.f32 %v904, 0.0
      %v969 = vmax.f32 %v905, 0.0
      %v970 = vmax.f32 %v906, 0.0
      %v971 = vmax.f32 %v907, 0.0
      %v972 = vmax.f32 %v908, 0.0
      %v973 = vmax.f32 %v909, 0.0
      %v974 = vmax.f32 %v910, 0.0
      %v975 = vmax.f32 %v911, 0.0
      %v976 = vmax.f32 %v912, 0.0
      %v977 = vmax.f32 %v913, 0.0
      %v978 = vmax.f32 %v914, 0.0
      %v979 = vmax.f32 %v915, 0.0
      %v980 = vpack.c.bf16 %v916, %v916
      %v981 = vpack.c.bf16 %v917, %v917
      %v982 = vpack.c.bf16 %v918, %v918
      %v983 = vpack.c.bf16 %v919, %v919
      %v984 = vpack.c.bf16 %v920, %v920
      %v985 = vpack.c.bf16 %v921, %v921
      %v986 = vpack.c.bf16 %v922, %v922
      %v987 = vpack.c.bf16 %v923, %v923
      %v988 = vpack.c.bf16 %v924, %v924
      %v989 = vpack.c.bf16 %v925, %v925
      %v990 = vpack.c.bf16 %v926, %v926
      %v991 = vpack.c.bf16 %v927, %v927
      %v992 = vpack.c.bf16 %v928, %v928
      %v993 = vpack.c.bf16 %v929, %v929
      %v994 = vpack.c.bf16 %v930, %v930
      %v995 = vpack.c.bf16 %v931, %v931
      %v996 = vpack.c.bf16 %v932, %v932
      %v997 = vpack.c.bf16 %v933, %v933
      %v998 = vpack.c.bf16 %v934, %v934
      %v999 = vpack.c.bf16 %v935, %v935
      %v1000 = vpack.c.bf16 %v936, %v936
      %v1001 = vpack.c.bf16 %v937, %v937
      %v1002 = vpack.c.bf16 %v938, %v938
      %v1003 = vpack.c.bf16 %v939, %v939
      %v1004 = vpack.c.bf16 %v940, %v940
      %v1005 = vpack.c.bf16 %v941, %v941
      %v1006 = vpack.c.bf16 %v942, %v942
      %v1007 = vpack.c.bf16 %v943, %v943
      %v1008 = vpack.c.bf16 %v944, %v944
      %v1009 = vpack.c.bf16 %v945, %v945
      %v1010 = vpack.c.bf16 %v946, %v946
      %v1011 = vpack.c.bf16 %v947, %v947
      %v1012 = vpack.c.bf16 %v948, %v948
      %v1013 = vpack.c.bf16 %v949, %v949
      %v1014 = vpack.c.bf16 %v950, %v950
      %v1015 = vpack.c.bf16 %v951, %v951
      %v1016 = vpack.c.bf16 %v952, %v952
      %v1017 = vpack.c.bf16 %v953, %v953
      %v1018 = vpack.c.bf16 %v954, %v954
      %v1019 = vpack.c.bf16 %v955, %v955
      %v1020 = vpack.c.bf16 %v956, %v956
      %v1021 = vpack.c.bf16 %v957, %v957
      %v1022 = vpack.c.bf16 %v958, %v958
      %v1023 = vpack.c.bf16 %v959, %v959
      %v1024 = vpack.c.bf16 %v960, %v960
      %v1025 = vpack.c.bf16 %v961, %v961
      %v1026 = vpack.c.bf16 %v962, %v962
      %v1027 = vpack.c.bf16 %v963, %v963
      %v1028 = vpack.c.bf16 %v964, %v964
      %v1029 = vpack.c.bf16 %v965, %v965
      %v1030 = vpack.c.bf16 %v966, %v966
      %v1031 = vpack.c.bf16 %v967, %v967
      %v1032 = vpack.c.bf16 %v968, %v968
      %v1033 = vpack.c.bf16 %v969, %v969
      %v1034 = vpack.c.bf16 %v970, %v970
      %v1035 = vpack.c.bf16 %v971, %v971
      %v1036 = vpack.c.bf16 %v972, %v972
      %v1037 = vpack.c.bf16 %v973, %v973
      %v1038 = vpack.c.bf16 %v974, %v974
      %v1039 = vpack.c.bf16 %v975, %v975
      %v1040 = vpack.c.bf16 %v976, %v976
      %v1041 = vpack.c.bf16 %v977, %v977
      %v1042 = vpack.c.bf16 %v978, %v978
      %v1043 = vpack.c.bf16 %v979, %v979
      %vm1044 = vcmask 125952
      %1045 = vst.msk [vmem:[%s3] sm:$0xf] %vm1044, %v980
      %1046 = vst.msk [vmem:[%s3 + $0x4] sm:$0xf] %vm1044, %v981
      %1047 = vst.msk [vmem:[%s3 + $0x8] sm:$0xf] %vm1044, %v982
      %1048 = vst.msk [vmem:[%s3 + $0xc] sm:$0xf] %vm1044, %v983
      %1049 = vst.msk [vmem:[%s3 + $0x10] sm:$0xf] %vm1044, %v984
      %1050 = vst.msk [vmem:[%s3 + $0x14] sm:$0xf] %vm1044, %v985
      %1051 = vst.msk [vmem:[%s3 + $0x18] sm:$0xf] %vm1044, %v986
      %1052 = vst.msk [vmem:[%s3 + $0x1c] sm:$0xf] %vm1044, %v987
      %1053 = vst.msk [vmem:[%s3 + $0x20] sm:$0xf] %vm1044, %v988
      %1054 = vst.msk [vmem:[%s3 + $0x24] sm:$0xf] %vm1044, %v989
      %1055 = vst.msk [vmem:[%s3 + $0x28] sm:$0xf] %vm1044, %v990
      %1056 = vst.msk [vmem:[%s3 + $0x2c] sm:$0xf] %vm1044, %v991
      %1057 = vst.msk [vmem:[%s3 + $0x30] sm:$0xf] %vm1044, %v992
      %1058 = vst.msk [vmem:[%s3 + $0x34] sm:$0xf] %vm1044, %v993
      %1059 = vst.msk [vmem:[%s3 + $0x38] sm:$0xf] %vm1044, %v994
      %1060 = vst.msk [vmem:[%s3 + $0x3c] sm:$0xf] %vm1044, %v995
      %1061 = vst.msk [vmem:[%s3 + $0x40] sm:$0xf] %vm1044, %v996
      %1062 = vst.msk [vmem:[%s3 + $0x44] sm:$0xf] %vm1044, %v997
      %1063 = vst.msk [vmem:[%s3 + $0x48] sm:$0xf] %vm1044, %v998
      %1064 = vst.msk [vmem:[%s3 + $0x4c] sm:$0xf] %vm1044, %v999
      %1065 = vst.msk [vmem:[%s3 + $0x50] sm:$0xf] %vm1044, %v1000
      %1066 = vst.msk [vmem:[%s3 + $0x54] sm:$0xf] %vm1044, %v1001
      %1067 = vst.msk [vmem:[%s3 + $0x58] sm:$0xf] %vm1044, %v1002
      %1068 = vst.msk [vmem:[%s3 + $0x5c] sm:$0xf] %vm1044, %v1003
      %1069 = vst.msk [vmem:[%s3 + $0x60] sm:$0xf] %vm1044, %v1004
      %1070 = vst.msk [vmem:[%s3 + $0x64] sm:$0xf] %vm1044, %v1005
      %1071 = vst.msk [vmem:[%s3 + $0x68] sm:$0xf] %vm1044, %v1006
      %1072 = vst.msk [vmem:[%s3 + $0x6c] sm:$0xf] %vm1044, %v1007
      %1073 = vst.msk [vmem:[%s3 + $0x70] sm:$0xf] %vm1044, %v1008
      %1074 = vst.msk [vmem:[%s3 + $0x74] sm:$0xf] %vm1044, %v1009
      %1075 = vst.msk [vmem:[%s3 + $0x78] sm:$0xf] %vm1044, %v1010
      %1076 = vst.msk [vmem:[%s3 + $0x7c] sm:$0xf] %vm1044, %v1011
      %1077 = vst.msk [vmem:[%s3 + $0x80] sm:$0xf] %vm1044, %v1012
      %1078 = vst.msk [vmem:[%s3 + $0x84] sm:$0xf] %vm1044, %v1013
      %1079 = vst.msk [vmem:[%s3 + $0x88] sm:$0xf] %vm1044, %v1014
      %1080 = vst.msk [vmem:[%s3 + $0x8c] sm:$0xf] %vm1044, %v1015
      %1081 = vst.msk [vmem:[%s3 + $0x90] sm:$0xf] %vm1044, %v1016
      %1082 = vst.msk [vmem:[%s3 + $0x94] sm:$0xf] %vm1044, %v1017
      %1083 = vst.msk [vmem:[%s3 + $0x98] sm:$0xf] %vm1044, %v1018
      %1084 = vst.msk [vmem:[%s3 + $0x9c] sm:$0xf] %vm1044, %v1019
      %1085 = vst.msk [vmem:[%s3 + $0xa0] sm:$0xf] %vm1044, %v1020
      %1086 = vst.msk [vmem:[%s3 + $0xa4] sm:$0xf] %vm1044, %v1021
      %1087 = vst.msk [vmem:[%s3 + $0xa8] sm:$0xf] %vm1044, %v1022
      %1088 = vst.msk [vmem:[%s3 + $0xac] sm:$0xf] %vm1044, %v1023
      %1089 = vst.msk [vmem:[%s3 + $0xb0] sm:$0xf] %vm1044, %v1024
      %1090 = vst.msk [vmem:[%s3 + $0xb4] sm:$0xf] %vm1044, %v1025
      %1091 = vst.msk [vmem:[%s3 + $0xb8] sm:$0xf] %vm1044, %v1026
      %1092 = vst.msk [vmem:[%s3 + $0xbc] sm:$0xf] %vm1044, %v1027
      %1093 = vst.msk [vmem:[%s3 + $0xc0] sm:$0xf] %vm1044, %v1028
      %1094 = vst.msk [vmem:[%s3 + $0xc4] sm:$0xf] %vm1044, %v1029
      %1095 = vst.msk [vmem:[%s3 + $0xc8] sm:$0xf] %vm1044, %v1030
      %1096 = vst.msk [vmem:[%s3 + $0xcc] sm:$0xf] %vm1044, %v1031
      %1097 = vst.msk [vmem:[%s3 + $0xd0] sm:$0xf] %vm1044, %v1032
      %1098 = vst.msk [vmem:[%s3 + $0xd4] sm:$0xf] %vm1044, %v1033
      %1099 = vst.msk [vmem:[%s3 + $0xd8] sm:$0xf] %vm1044, %v1034
      %1100 = vst.msk [vmem:[%s3 + $0xdc] sm:$0xf] %vm1044, %v1035
      %1101 = vst.msk [vmem:[%s3 + $0xe0] sm:$0xf] %vm1044, %v1036
      %1102 = vst.msk [vmem:[%s3 + $0xe4] sm:$0xf] %vm1044, %v1037
      %1103 = vst.msk [vmem:[%s3 + $0xe8] sm:$0xf] %vm1044, %v1038
      %1104 = vst.msk [vmem:[%s3 + $0xec] sm:$0xf] %vm1044, %v1039
      %1105 = vst.msk [vmem:[%s3 + $0xf0] sm:$0xf] %vm1044, %v1040
      %1106 = vst.msk [vmem:[%s3 + $0xf4] sm:$0xf] %vm1044, %v1041
      %1107 = vst.msk [vmem:[%s3 + $0xf8] sm:$0xf] %vm1044, %v1042
      %1108 = vst.msk [vmem:[%s3 + $0xfc] sm:$0xf] %vm1044, %v1043
    $region25: #{tpu_custom_call.1} parent=1 // pred_fallthru
      _
    // Predicated region
    $region26: #{tpu_custom_call.1} parent=1 // pred_check
      _
    $region27: #{tpu_custom_call.1} parent=1 // pred_check_branch
      %1110 = sbr.rel (0) target = $region29
    $region28: #{tpu_custom_call.1} parent=1 // pred_region
      _
    $region29: #{tpu_custom_call.1} parent=1 // pred_fallthru
      _
    // Predicated region
    $region30: #{tpu_custom_call.1} parent=1 // pred_check
      _
    $region31: #{tpu_custom_call.1} parent=1 // pred_check_branch
      %1112 = sbr.rel (0) target = $region33
    $region32: #{tpu_custom_call.1} parent=1 // pred_region
      _
    $region33: #{tpu_custom_call.1} parent=1 // pred_fallthru
      _
    %1113 = vsyncpa [#allocation4], 1

</llo_original>
